<compile_context>
chip_gen: v5e
topology: v5e:2x2
jax: 0.10.0
libtpu: 0.0.40
codegen_flags: <defaults>
</compile_context>

<pallas_src>
import math

import jax
import jax.numpy as jnp
from jax.experimental import pallas as pl
from jax.experimental.pallas import tpu as pltpu


# ----------------------------------------------------------------------------
# Fused FFN kernel.
# Grid: (i over M tiles, f over d_ff tiles).  For each (i, f):
#   h   = relu(x_i @ W1[:, f] + b1[f])           (tm, tf)
#   acc += h @ W2[f, :]                          (tm, d_model)  -- f32 scratch
# At the last f step:  out_i = acc + b2.
# ----------------------------------------------------------------------------
def _ffn_kernel(x_ref, w1_ref, b1_ref, w2_ref, b2_ref, o_ref, acc_ref):
    f = pl.program_id(1)

    @pl.when(f == 0)
    def _init():
        acc_ref[...] = jnp.zeros_like(acc_ref)

    # linear1 tile + bias + ReLU (hidden tile stays in vregs/VMEM; never hits HBM)
    h = jnp.dot(x_ref[...], w1_ref[...], preferred_element_type=jnp.float32)
    h = h + b1_ref[...]
    h = jnp.maximum(h, 0.0)
    # TODO(synk): training-mode dropout would mask `h` here; eval-mode is identity.

    # linear2 partial contraction over this d_ff tile, accumulated in f32.
    acc_ref[...] += jnp.dot(
        h.astype(w2_ref.dtype), w2_ref[...], preferred_element_type=jnp.float32
    )

    @pl.when(f == pl.num_programs(1) - 1)
    def _finalize():
        o_ref[...] = (acc_ref[...] + b2_ref[...]).astype(o_ref.dtype)


def _pick_tile(dim, target):
    """Largest clean tile: `target` if it divides `dim`, else the full extent."""
    return target if (dim > target and dim % target == 0) else dim


def pallas_feed_forward(x, w1, b1, w2, b2, *, tm=256, tf=512):
    """FeedForward forward pass.

    x  : (..., d_model)  activations
    w1 : (d_ff, d_model), b1: (d_ff,)     -- PyTorch nn.Linear(d_model, d_ff) layout
    w2 : (d_model, d_ff), b2: (d_model,)  -- PyTorch nn.Linear(d_ff, d_model) layout
    """
    orig_shape = x.shape
    d_model = orig_shape[-1]
    d_ff = w1.shape[0]
    x2d = x.reshape(-1, d_model)
    M = x2d.shape[0]

    # One-time wrapper-side transpose so the kernel consumes (in, out) weights
    # directly (no per-step XLU transpose inside the kernel).
    w1t = jnp.asarray(w1).T            # (d_model, d_ff)
    w2t = jnp.asarray(w2).T            # (d_ff, d_model)
    b1r = jnp.asarray(b1).reshape(1, d_ff)
    b2r = jnp.asarray(b2).reshape(1, d_model)

    tm_ = _pick_tile(M, tm)
    tf_ = _pick_tile(d_ff, tf)
    grid = (M // tm_, d_ff // tf_)

    out = pl.pallas_call(
        _ffn_kernel,
        out_shape=jax.ShapeDtypeStruct((M, d_model), x.dtype),
        grid_spec=pltpu.PrefetchScalarGridSpec(
            num_scalar_prefetch=0,
            grid=grid,
            in_specs=[
                pl.BlockSpec((tm_, d_model), lambda i, f: (i, 0)),  # x tile
                pl.BlockSpec((d_model, tf_), lambda i, f: (0, f)),  # W1 tile
                pl.BlockSpec((1, tf_), lambda i, f: (0, f)),        # b1 tile
                pl.BlockSpec((tf_, d_model), lambda i, f: (f, 0)),  # W2 tile
                pl.BlockSpec((1, d_model), lambda i, f: (0, 0)),    # b2
            ],
            out_specs=pl.BlockSpec((tm_, d_model), lambda i, f: (i, 0)),
            scratch_shapes=[pltpu.VMEM((tm_, d_model), jnp.float32)],
        ),
        compiler_params=pltpu.CompilerParams(
            dimension_semantics=("parallel", "arbitrary"),
        ),
    )(x2d, w1t, b1r, w2t, b2r)

    return out.reshape(orig_shape)


# ----------------------------------------------------------------------------
# Pure-JAX reference (for correctness check) — mirrors the PyTorch module in eval mode.
# ----------------------------------------------------------------------------
def reference_feed_forward(x, w1, b1, w2, b2):
    h = jnp.maximum(x @ w1.T + b1, 0.0)   # relu(linear1(x)); dropout = identity (eval)
    return h @ w2.T + b2                  # linear2(...)


# ----------------------------------------------------------------------------
def init_params(key, d_model, d_ff):
    """Deterministic init mirroring nn.Linear shapes/layout."""
    k1, k2, k3, k4 = jax.random.split(key, 4)
    b_in = 1.0 / math.sqrt(d_model)
    b_hid = 1.0 / math.sqrt(d_ff)
    u = lambda k, shape, b: jax.random.uniform(k, shape, jnp.float32, -b, b)
    return {
        "w1": u(k1, (d_ff, d_model), b_in),   # linear1.weight
        "b1": u(k2, (d_ff,), b_in),           # linear1.bias
        "w2": u(k3, (d_model, d_ff), b_hid),  # linear2.weight
        "b2": u(k4, (d_model,), b_hid),       # linear2.bias
    }


if __name__ == "__main__":
    B, S, d_model, d_ff = 2, 8, 32, 64

    root = jax.random.PRNGKey(0)
    kp, kx = jax.random.split(root)
    params = init_params(kp, d_model, d_ff)
    x = jax.random.normal(kx, (B, S, d_model), jnp.float32)

    out = pallas_feed_forward(
        x, params["w1"], params["b1"], params["w2"], params["b2"]
    )
    out = jax.block_until_ready(out)

    ref = reference_feed_forward(
        x, params["w1"], params["b1"], params["w2"], params["b2"]
    )

    assert out.shape == (B, S, d_model)
    assert jnp.allclose(out, ref, atol=1e-5, rtol=1e-4), (
        float(jnp.max(jnp.abs(out - ref)))
    )

    print("KERNEL_OK")
</pallas_src>

<mosaic_0001>
module attributes {stable_mosaic.version = 11 : i64} {
  func.func @_ffn_kernel(%arg0: i32, %arg1: i32, %arg2: memref<16x32xf32, #tpu.memory_space<vmem>>, %arg3: memref<32x64xf32, #tpu.memory_space<vmem>>, %arg4: memref<1x64xf32, #tpu.memory_space<vmem>>, %arg5: memref<64x32xf32, #tpu.memory_space<vmem>>, %arg6: memref<1x32xf32, #tpu.memory_space<vmem>>, %arg7: memref<16x32xf32, #tpu.memory_space<vmem>>, %arg8: memref<16x32xf32, #tpu.memory_space<vmem>>) attributes {dimension_semantics = [#tpu.dimension_semantics<parallel>, #tpu.dimension_semantics<arbitrary>], iteration_bounds = array<i64: 1, 1>, scalar_prefetch = 0 : i64, scratch_operands = 1 : i64, tpu.core_type = #tpu.core_type<tc>, window_params = [{transform_indices = @transform_0, window_bounds = array<i64: 16, 32>}, {transform_indices = @transform_1, window_bounds = array<i64: 32, 64>}, {transform_indices = @transform_2, window_bounds = array<i64: 1, 64>}, {transform_indices = @transform_3, window_bounds = array<i64: 64, 32>}, {pipeline_mode = #tpu.pipeline_mode<synchronous>, transform_indices = @transform_4, window_bounds = array<i64: 1, 32>}, {transform_indices = @transform_5, window_bounds = array<i64: 16, 32>}]} {
    %c0_i32 = arith.constant 0 : i32
    %0 = arith.cmpi eq, %arg1, %c0_i32 : i32
    %1 = arith.extui %0 : i1 to i32
    %c0_i32_0 = arith.constant 0 : i32
    %2 = arith.cmpi ne, %1, %c0_i32_0 : i32
    scf.if %2 {
      %cst_16 = arith.constant 0.000000e+00 : f32
      %19 = vector.broadcast %cst_16 : f32 to vector<16x32xf32>
      %c0_17 = arith.constant 0 : index
      %c0_18 = arith.constant 0 : index
      %20 = vector.load %arg8[%c0_17, %c0_18] : memref<16x32xf32, #tpu.memory_space<vmem>>, vector<16x32xf32>
      tpu.vector_store %arg8[%c0_17, %c0_18], %19 {strides = array<i32>} : memref<16x32xf32, #tpu.memory_space<vmem>>, vector<16x32xf32>,
    } else {
    }
    %c0 = arith.constant 0 : index
    %c0_1 = arith.constant 0 : index
    %3 = vector.load %arg2[%c0, %c0_1] : memref<16x32xf32, #tpu.memory_space<vmem>>, vector<16x32xf32>
    %c0_2 = arith.constant 0 : index
    %c0_3 = arith.constant 0 : index
    %4 = vector.load %arg3[%c0_2, %c0_3] : memref<32x64xf32, #tpu.memory_space<vmem>>, vector<32x64xf32>
    %cst = arith.constant dense<0.000000e+00> : vector<16x64xf32>
    %5 = tpu.matmul %3, %4, %cst {dimension_numbers = #tpu.dot_dimension_numbers<[1], [0], [0], [1], [0, 0, 1, 1], [], []>} : vector<16x32xf32>, vector<32x64xf32>, vector<16x64xf32> -> vector<16x64xf32>
    %c0_4 = arith.constant 0 : index
    %c0_5 = arith.constant 0 : index
    %6 = vector.load %arg4[%c0_4, %c0_5] : memref<1x64xf32, #tpu.memory_space<vmem>>, vector<1x64xf32>
    %7 = vector.broadcast %6 : vector<1x64xf32> to vector<16x64xf32>
    %8 = arith.addf %5, %7 : vector<16x64xf32>
    %cst_6 = arith.constant 0.000000e+00 : f32
    %9 = vector.broadcast %cst_6 : f32 to vector<16x64xf32>
    %10 = arith.maximumf %8, %9 : vector<16x64xf32>
    %c0_7 = arith.constant 0 : index
    %c0_8 = arith.constant 0 : index
    %11 = vector.load %arg8[%c0_7, %c0_8] : memref<16x32xf32, #tpu.memory_space<vmem>>, vector<16x32xf32>
    %c0_9 = arith.constant 0 : index
    %c0_10 = arith.constant 0 : index
    %12 = vector.load %arg5[%c0_9, %c0_10] : memref<64x32xf32, #tpu.memory_space<vmem>>, vector<64x32xf32>
    %cst_11 = arith.constant dense<0.000000e+00> : vector<16x32xf32>
    %13 = tpu.matmul %10, %12, %cst_11 {dimension_numbers = #tpu.dot_dimension_numbers<[1], [0], [0], [1], [0, 0, 1, 1], [], []>} : vector<16x64xf32>, vector<64x32xf32>, vector<16x32xf32> -> vector<16x32xf32>
    %14 = arith.addf %11, %13 : vector<16x32xf32>
    %c0_12 = arith.constant 0 : index
    %c0_13 = arith.constant 0 : index
    %15 = vector.load %arg8[%c0_12, %c0_13] : memref<16x32xf32, #tpu.memory_space<vmem>>, vector<16x32xf32>
    tpu.vector_store %arg8[%c0_12, %c0_13], %14 {strides = array<i32>} : memref<16x32xf32, #tpu.memory_space<vmem>>, vector<16x32xf32>,
    %c0_i32_14 = arith.constant 0 : i32
    %16 = arith.cmpi eq, %arg1, %c0_i32_14 : i32
    %17 = arith.extui %16 : i1 to i32
    %c0_i32_15 = arith.constant 0 : i32
    %18 = arith.cmpi ne, %17, %c0_i32_15 : i32
    scf.if %18 {
      %c0_16 = arith.constant 0 : index
      %c0_17 = arith.constant 0 : index
      %19 = vector.load %arg8[%c0_16, %c0_17] : memref<16x32xf32, #tpu.memory_space<vmem>>, vector<16x32xf32>
      %c0_18 = arith.constant 0 : index
      %c0_19 = arith.constant 0 : index
      %20 = vector.load %arg6[%c0_18, %c0_19] : memref<1x32xf32, #tpu.memory_space<vmem>>, vector<1x32xf32>
      %21 = vector.broadcast %20 : vector<1x32xf32> to vector<16x32xf32>
      %22 = arith.addf %19, %21 : vector<16x32xf32>
      %c0_20 = arith.constant 0 : index
      %c0_21 = arith.constant 0 : index
      %23 = vector.load %arg7[%c0_20, %c0_21] : memref<16x32xf32, #tpu.memory_space<vmem>>, vector<16x32xf32>
      tpu.vector_store %arg7[%c0_20, %c0_21], %22 {strides = array<i32>} : memref<16x32xf32, #tpu.memory_space<vmem>>, vector<16x32xf32>,
    } else {
    }
    return
  }
  func.func @transform_0(%arg0: i32, %arg1: i32) -> (i32, i32) {
    %c0_i32 = arith.constant 0 : i32
    %c0_i32_0 = arith.constant 0 : i32
    return %arg0, %c0_i32 : i32, i32
  }
  func.func @transform_1(%arg0: i32, %arg1: i32) -> (i32, i32) {
    %c0_i32 = arith.constant 0 : i32
    %c0_i32_0 = arith.constant 0 : i32
    return %c0_i32, %arg1 : i32, i32
  }
  func.func @transform_2(%arg0: i32, %arg1: i32) -> (i32, i32) {
    %c0_i32 = arith.constant 0 : i32
    %c0_i32_0 = arith.constant 0 : i32
    return %c0_i32, %arg1 : i32, i32
  }
  func.func @transform_3(%arg0: i32, %arg1: i32) -> (i32, i32) {
    %c0_i32 = arith.constant 0 : i32
    %c0_i32_0 = arith.constant 0 : i32
    return %arg1, %c0_i32 : i32, i32
  }
  func.func @transform_4(%arg0: i32, %arg1: i32) -> (i32, i32) {
    %c0_i32 = arith.constant 0 : i32
    %c0_i32_0 = arith.constant 0 : i32
    %c0_i32_1 = arith.constant 0 : i32
    return %c0_i32, %c0_i32_0 : i32, i32
  }
  func.func @transform_5(%arg0: i32, %arg1: i32) -> (i32, i32) {
    %c0_i32 = arith.constant 0 : i32
    %c0_i32_0 = arith.constant 0 : i32
    return %arg0, %c0_i32 : i32, i32
  }
}

</mosaic_0001>

<llo_original>
// kernel: tpu_custom_call.1
$region0: #{tpu_custom_call.1}
  #allocation0 [shape = 'u32[]', space=smem, size = 0x4, offset = 0x4, fixed_abs, tag = 'smem constant byte address 0x4 - core index']
  #allocation1 [shape = 'u32[72,128]{1,0:T(1,128)}', space=vmem, size = 0x9000, scoped, tag = 'internal scratch']
  #allocation2 [shape = 'f32[16,32]{1,0:T(8,128)}', space=vmem, size = 0x2000, scoped, tag = 'scratch operand']
  %s0 = inlined_call_operand.vmem [shape: f32[16,32], index: 0, kind: input, shape index: {}]
  %s1 = inlined_call_operand.vmem [shape: f32[32,64], index: 1, kind: input, shape index: {}]
  %s2 = inlined_call_operand.vmem [shape: f32[1,64], index: 2, kind: input, shape index: {}]
  %s3 = inlined_call_operand.vmem [shape: f32[64,32], index: 3, kind: input, shape index: {}]
  %s4 = inlined_call_operand.vmem [shape: f32[1,32], index: 4, kind: input, shape index: {}]
  %s5 = inlined_call_operand.hbm [shape: f32[16,32], index: 5, kind: output, shape index: {}]
  %s6 = sld [smem:[#allocation0]]
  $region38: #{tpu_custom_call.1} parent=0
    _
  %s8 = ssub.s32 1, %s6
  %s9 = scalar_select 0, %s8, %s6
  $region1: #{tpu_custom_call.1} parent=0
    #allocation3 [shape = 'u8[8192]{0}', space=vmem, size = 0x2000, scoped, tag = 'output window, operand 0, single buffered']
    #allocation4 [shape = 's32[1]{0}', space=sflag, size = 0x4, scoped, tag = 'scoped memory for tpu_custom_call.1']
    %10 = vsyncpa [#allocation4], 0
    // Predicated region
    $region2: #{tpu_custom_call.1} parent=1 // pred_check
      _
    $region3: #{tpu_custom_call.1} parent=1 // pred_check_branch
      %12 = sbr.rel (0) target = $region5
    $region4: #{tpu_custom_call.1} parent=1 // pred_region
      _
    $region5: #{tpu_custom_call.1} parent=1 // pred_fallthru
      _
    // Predicated region
    $region6: #{tpu_custom_call.1} parent=1 // pred_check
      _
    $region7: #{tpu_custom_call.1} parent=1 // pred_check_branch
      %14 = sbr.rel (0) target = $region9
    $region8: #{tpu_custom_call.1} parent=1 // pred_region
      _
    $region9: #{tpu_custom_call.1} parent=1 // pred_fallthru
      _
    // Predicated region
    $region10: #{tpu_custom_call.1} parent=1 // pred_check
      _
    $region11: #{tpu_custom_call.1} parent=1 // pred_check_branch
      %16 = sbr.rel (0) target = $region13
    $region12: #{tpu_custom_call.1} parent=1 // pred_region
      _
    $region13: #{tpu_custom_call.1} parent=1 // pred_fallthru
      _
    // Predicated region
    $region14: #{tpu_custom_call.1} parent=1 // pred_check
      _
    $region15: #{tpu_custom_call.1} parent=1 // pred_check_branch
      %18 = sbr.rel (0) target = $region17
    $region16: #{tpu_custom_call.1} parent=1 // pred_region
      _
    $region17: #{tpu_custom_call.1} parent=1 // pred_fallthru
      _
    // Predicated region
    $region18: #{tpu_custom_call.1} parent=1 // pred_check
      _
    $region19: #{tpu_custom_call.1} parent=1 // pred_check_branch
      %20 = sbr.rel (0) target = $region21
    $region20: #{tpu_custom_call.1} parent=1 // pred_region
      _
    $region21: #{tpu_custom_call.1} parent=1 // pred_fallthru
      _
    %p21 = scmp.eq.s32.totalorder 0, 0
    // Predicated region
    $region22: #{tpu_custom_call.1} parent=1 // pred_check
      %p22 = pneg %p21
    $region23: #{tpu_custom_call.1} parent=1 // pred_check_branch
      %24 = sbr.rel (%p22) target = $region25
    $region24: #{tpu_custom_call.1} parent=1 // pred_region
      %vm25 = vcmask 261120
      %26 = vst.msk [vmem:[#allocation2] sm:$0xff] %vm25, 0.0
      %27 = vst.msk [vmem:[#allocation2 + $0x8] sm:$0xff] %vm25, 0.0
    $region25: #{tpu_custom_call.1} parent=1 // pred_fallthru
      _
    %v28 = vld [vmem:[%s0] sm:$0xff]
    %v29 = vld [vmem:[%s0 + $0x8] sm:$0xff]
    %v30 = vld [vmem:[%s1] sm:$0xff]
    %v31 = vld [vmem:[%s1 + $0x8] sm:$0xff]
    %v32 = vld [vmem:[%s1 + $0x10] sm:$0xff]
    %v33 = vld [vmem:[%s1 + $0x18] sm:$0xff]
    %v34 = vld [vmem:[%s2] sm:$0x1]
    %v36 = vperm.slane %v34, 0
    %vm38 = vcmask 261120
    %v40 = vsel %vm38, %v28, 0
    %v43 = vsel %vm38, %v29, 0
    %45 = vmatpush.msra.mxu0 0.0
    %46 = vmatpush.msra.mxu0 0.0
    %47 = vmatpush.msra.mxu0 0.0
    %48 = vmatpush.msra.mxu0 0.0
    %49 = vmatpush.msra.mxu0 0.0
    %50 = vmatpush.msra.mxu0 0.0
    %51 = vmatpush.msra.mxu0 0.0
    %52 = vmatpush.msra.mxu0 0.0
    %53 = vmatpush.msra.mxu0 0.0
    %54 = vmatpush.msra.mxu0 0.0
    %55 = vmatpush.msra.mxu0 0.0
    %56 = vmatpush.msra.mxu0 0.0
    %57 = vmatpush.msra.mxu0 %v33
    %58 = vmatpush.msra.mxu0 %v32
    %59 = vmatpush.msra.mxu0 %v31
    %60 = vmatpush.msra.mxu0 %v30
    %61 = vmatmul.f32.gmra.mxu0 %v40
    %v62 = vpop.f32.mrf.mxu0
    %v63 = vadd.f32 %v36, %v62
    %64 = vmatmul.f32.gmra.mxu0 %v43
    %v65 = vpop.f32.mrf.mxu0
    %v66 = vadd.f32 %v36, %v65
    %67 = vdwg.mxu0
    %v68 = vmax.f32 %v63, 0.0
    %v69 = vmax.f32 %v66, 0.0
    %v70 = vld [vmem:[#allocation2] sm:$0xff]
    %v71 = vld [vmem:[#allocation2 + $0x8] sm:$0xff]
    %v72 = vld [vmem:[%s3] sm:$0xff]
    %v73 = vld [vmem:[%s3 + $0x8] sm:$0xff]
    %v74 = vld [vmem:[%s3 + $0x10] sm:$0xff]
    %v75 = vld [vmem:[%s3 + $0x18] sm:$0xff]
    %v76 = vld [vmem:[%s3 + $0x20] sm:$0xff]
    %v77 = vld [vmem:[%s3 + $0x28] sm:$0xff]
    %v78 = vld [vmem:[%s3 + $0x30] sm:$0xff]
    %v79 = vld [vmem:[%s3 + $0x38] sm:$0xff]
    %vm80 = vcmask 523264
    %v82 = vsel %vm80, %v68, 0
    %v85 = vsel %vm80, %v69, 0
    %87 = vmatpush.msra.mxu0 0.0
    %88 = vmatpush.msra.mxu0 0.0
    %89 = vmatpush.msra.mxu0 0.0
    %90 = vmatpush.msra.mxu0 0.0
    %91 = vmatpush.msra.mxu0 0.0
    %92 = vmatpush.msra.mxu0 0.0
    %93 = vmatpush.msra.mxu0 0.0
    %94 = vmatpush.msra.mxu0 0.0
    %95 = vmatpush.msra.mxu0 %v79
    %96 = vmatpush.msra.mxu0 %v78
    %97 = vmatpush.msra.mxu0 %v77
    %98 = vmatpush.msra.mxu0 %v76
    %99 = vmatpush.msra.mxu0 %v75
    %100 = vmatpush.msra.mxu0 %v74
    %101 = vmatpush.msra.mxu0 %v73
    %102 = vmatpush.msra.mxu0 %v72
    %103 = vmatmul.f32.gmra.mxu0 %v82
    %v104 = vpop.f32.mrf.mxu0
    %v105 = vadd.f32 0.0, %v104
    %106 = vmatmul.f32.gmra.mxu0 %v85
    %v107 = vpop.f32.mrf.mxu0
    %v108 = vadd.f32 0.0, %v107
    %109 = vdwg.mxu0
    %v110 = vadd.f32 %v70, %v105
    %v111 = vadd.f32 %v71, %v108
    %112 = vst.msk [vmem:[#allocation2] sm:$0xff] %vm38, %v110
    %113 = vst.msk [vmem:[#allocation2 + $0x8] sm:$0xff] %vm38, %v111
    // Predicated region
    $region26: #{tpu_custom_call.1} parent=1 // pred_check
      %p114 = pneg %p21
    $region27: #{tpu_custom_call.1} parent=1 // pred_check_branch
      %116 = sbr.rel (%p114) target = $region29
    $region28: #{tpu_custom_call.1} parent=1 // pred_region
      %v117 = vld [vmem:[#allocation2] sm:$0xff]
      %v118 = vld [vmem:[#allocation2 + $0x8] sm:$0xff]
      %v119 = vld [vmem:[%s4] sm:$0x1]
      %v121 = vperm.slane %v119, 0
      %v123 = vadd.f32 %v117, %v121
      %v124 = vadd.f32 %v118, %v121
      %125 = vst.msk [vmem:[#allocation3] sm:$0xff] %vm38, %v123
      %126 = vst.msk [vmem:[#allocation3 + $0x8] sm:$0xff] %vm38, %v124
    $region29: #{tpu_custom_call.1} parent=1 // pred_fallthru
      _
    // Predicated region
    $region30: #{tpu_custom_call.1} parent=1 // pred_check
      _
    $region31: #{tpu_custom_call.1} parent=1 // pred_check_branch
      %128 = sbr.rel (0) target = $region33
    $region32: #{tpu_custom_call.1} parent=1 // pred_region
      %130 = vsyncadd [#allocation4], 0
      %s131 = sshll.u32 [#allocation3], 4
      %s132 = int_to_ptr.vmem [resolvable:$true] %s131
      %s133 = sshll.u32 %s5, 4
      %s134 = int_to_ptr.hbm [resolvable:$true] %s133
      %139 = dma.vmem_to_hbm [thread:$0]  %s132, 256, %s134, [#allocation4], 128, 128, 8
    $region33: #{tpu_custom_call.1} parent=1 // pred_fallthru
      _
    // Predicated region
    $region34: #{tpu_custom_call.1} parent=1 // pred_check
      _
    $region35: #{tpu_custom_call.1} parent=1 // pred_check_branch
      %141 = sbr.rel (0) target = $region37
    $region36: #{tpu_custom_call.1} parent=1 // pred_region
      %143 = dma.done [#allocation4], 256
    $region37: #{tpu_custom_call.1} parent=1 // pred_fallthru
      _
    %144 = vsyncpa [#allocation4], 1

</llo_original>
